<compile_context>
chip_gen: v7x
topology: tpu7x:2x2x1
jax: 0.10.0
libtpu: 0.0.40
codegen_flags: <defaults>
</compile_context>

<pallas_src>
import functools

import jax
import jax.numpy as jnp
from jax.experimental import pallas as pl
from jax.experimental.pallas import tpu as pltpu


def _round_up(v: int, m: int) -> int:
    return ((v + m - 1) // m) * m


def _min_dist_kernel(x_ref, y_ref, out_ref, *, xmin, ymin, xmax, ymax):
    # x_ref / y_ref / out_ref: (tb, tn) VMEM blocks. Compute in f32 on the VPU.
    x = x_ref[...].astype(jnp.float32)
    y = y_ref[...].astype(jnp.float32)
    dx = jnp.maximum(x - xmax, xmin - x)      # == -min(min(xmax-x,0), min(x-xmin,0)) after clamp
    dy = jnp.maximum(y - ymax, ymin - y)
    d = jnp.maximum(jnp.maximum(dx, dy), jnp.float32(0.0))
    out_ref[...] = d.astype(out_ref.dtype)


def determine_min_dist_boundary(x, y, *, xmin, ymin, xmax, ymax,
                                block_rows=256, block_cols=2048):
    """x, y: (B, N) floating arrays (same shape & dtype); bounds are static
    Python floats (model constants).  Returns min-distance-outside-boundary
    in the input dtype."""
    assert x.shape == y.shape, "x and y must have the same shape"
    assert x.dtype == y.dtype, "x and y must have the same dtype"
    assert jnp.issubdtype(x.dtype, jnp.floating), "inputs must be floating point"
    B, N = x.shape
    out_dtype = x.dtype

    # Lane-dense tiles: multiples of (8, 128), capped so double-buffered
    # x/y/out blocks stay well under even v5e's 16 MiB default scoped VMEM.
    tb = min(_round_up(B, 8), block_rows)
    tn = min(_round_up(N, 128), block_cols)
    grid = (pl.cdiv(B, tb), pl.cdiv(N, tn))

    kernel = functools.partial(
        _min_dist_kernel,
        xmin=float(xmin), ymin=float(ymin),
        xmax=float(xmax), ymax=float(ymax),
    )

    itemsize = jnp.dtype(x.dtype).itemsize
    cost = pl.CostEstimate(
        flops=8 * B * N,
        transcendentals=0,
        bytes_accessed=2 * B * N * itemsize + B * N * jnp.dtype(out_dtype).itemsize,
    )

    return pl.pallas_call(
        kernel,
        out_shape=jax.ShapeDtypeStruct((B, N), out_dtype),
        grid=grid,
        in_specs=[
            pl.BlockSpec((tb, tn), lambda i, j: (i, j)),
            pl.BlockSpec((tb, tn), lambda i, j: (i, j)),
        ],
        out_specs=pl.BlockSpec((tb, tn), lambda i, j: (i, j)),
        compiler_params=pltpu.CompilerParams(
            dimension_semantics=("parallel", "parallel"),
        ),
        cost_estimate=cost,
    )(x, y)


if __name__ == "__main__":
    # Deterministic synthetic "Params": Environment_limits = [[-10, 10], [-10, 10]],
    # car_size = 1.0  ->  xmin = ymin = -9, xmax = ymax = 9 (static model constants).
    env_limits = [[-10.0, 10.0], [-10.0, 10.0]]
    car_size = 1.0
    xmin = env_limits[0][0] + car_size
    ymin = env_limits[1][0] + car_size
    xmax = env_limits[0][1] - car_size
    ymax = env_limits[1][1] - car_size

    key = jax.random.PRNGKey(0)
    kx, ky = jax.random.split(key)
    B, N = 8, 128
    x = jax.random.uniform(kx, (B, N), jnp.float32, minval=-12.0, maxval=12.0)
    y = jax.random.uniform(ky, (B, N), jnp.float32, minval=-12.0, maxval=12.0)

    out = determine_min_dist_boundary(x, y, xmin=xmin, ymin=ymin, xmax=xmax, ymax=ymax)
    out = jax.block_until_ready(out)

    # Pure-JAX reference using the original (min-based) torch formulation.
    d1 = jnp.minimum(xmax - x, 0.0)
    d2 = jnp.minimum(x - xmin, 0.0)
    d3 = jnp.minimum(ymax - y, 0.0)
    d4 = jnp.minimum(y - ymin, 0.0)
    ref = -jnp.minimum(jnp.minimum(d1, d2), jnp.minimum(d3, d4))
    assert out.shape == ref.shape
    assert out.dtype == ref.dtype
    assert jnp.allclose(out, ref, atol=1e-6), "mismatch vs reference"

    print("KERNEL_OK")
</pallas_src>

<mosaic_0001>
module attributes {stable_mosaic.version = 11 : i64} {
  func.func @_min_dist_kernel(%arg0: i32, %arg1: i32, %arg2: memref<8x128xf32, #tpu.memory_space<vmem>>, %arg3: memref<8x128xf32, #tpu.memory_space<vmem>>, %arg4: memref<8x128xf32, #tpu.memory_space<vmem>>) attributes {dimension_semantics = [#tpu.dimension_semantics<parallel>, #tpu.dimension_semantics<parallel>], iteration_bounds = array<i64: 1, 1>, scalar_prefetch = 0 : i64, scratch_operands = 0 : i64, tpu.core_type = #tpu.core_type<tc>, window_params = [{transform_indices = @transform_0, window_bounds = array<i64: 8, 128>}, {transform_indices = @transform_1, window_bounds = array<i64: 8, 128>}, {transform_indices = @transform_2, window_bounds = array<i64: 8, 128>}]} {
    %c0 = arith.constant 0 : index
    %c0_0 = arith.constant 0 : index
    %0 = vector.load %arg2[%c0, %c0_0] : memref<8x128xf32, #tpu.memory_space<vmem>>, vector<8x128xf32>
    %c0_1 = arith.constant 0 : index
    %c0_2 = arith.constant 0 : index
    %1 = vector.load %arg3[%c0_1, %c0_2] : memref<8x128xf32, #tpu.memory_space<vmem>>, vector<8x128xf32>
    %cst = arith.constant 9.000000e+00 : f32
    %2 = vector.broadcast %cst : f32 to vector<8x128xf32>
    %3 = arith.subf %0, %2 : vector<8x128xf32>
    %cst_3 = arith.constant -9.000000e+00 : f32
    %4 = vector.broadcast %cst_3 : f32 to vector<8x128xf32>
    %5 = arith.subf %4, %0 : vector<8x128xf32>
    %6 = arith.maximumf %3, %5 : vector<8x128xf32>
    %cst_4 = arith.constant 9.000000e+00 : f32
    %7 = vector.broadcast %cst_4 : f32 to vector<8x128xf32>
    %8 = arith.subf %1, %7 : vector<8x128xf32>
    %cst_5 = arith.constant -9.000000e+00 : f32
    %9 = vector.broadcast %cst_5 : f32 to vector<8x128xf32>
    %10 = arith.subf %9, %1 : vector<8x128xf32>
    %11 = arith.maximumf %8, %10 : vector<8x128xf32>
    %12 = arith.maximumf %6, %11 : vector<8x128xf32>
    %cst_6 = arith.constant 0.000000e+00 : f32
    %13 = vector.broadcast %cst_6 : f32 to vector<8x128xf32>
    %14 = arith.maximumf %12, %13 : vector<8x128xf32>
    %c0_7 = arith.constant 0 : index
    %c0_8 = arith.constant 0 : index
    %15 = vector.load %arg4[%c0_7, %c0_8] : memref<8x128xf32, #tpu.memory_space<vmem>>, vector<8x128xf32>
    tpu.vector_store %arg4[%c0_7, %c0_8], %14 {strides = array<i32>} : memref<8x128xf32, #tpu.memory_space<vmem>>, vector<8x128xf32>,
    return
  }
  func.func @transform_0(%arg0: i32, %arg1: i32) -> (i32, i32) {
    %c0_i32 = arith.constant 0 : i32
    return %arg0, %arg1 : i32, i32
  }
  func.func @transform_1(%arg0: i32, %arg1: i32) -> (i32, i32) {
    %c0_i32 = arith.constant 0 : i32
    return %arg0, %arg1 : i32, i32
  }
  func.func @transform_2(%arg0: i32, %arg1: i32) -> (i32, i32) {
    %c0_i32 = arith.constant 0 : i32
    return %arg0, %arg1 : i32, i32
  }
}

</mosaic_0001>

<llo_original>
// kernel: tpu_custom_call.1
$region0: #{tpu_custom_call.1}
  #allocation0 [shape = 'u32[]', space=smem, size = 0x4, offset = 0x4, fixed_abs, tag = 'smem constant byte address 0x4 - core index']
  #allocation1 [shape = 'u32[144,128]{1,0:T(1,128)}', space=vmem, size = 0x12000, scoped, tag = 'internal scratch']
  %s0 = inlined_call_operand.hbm [shape: f32[8,128], index: 0, kind: input, shape index: {}]
  %s1 = inlined_call_operand.hbm [shape: f32[8,128], index: 1, kind: input, shape index: {}]
  %s2 = inlined_call_operand.hbm [shape: f32[8,128], index: 2, kind: output, shape index: {}]
  %s3 = sld [smem:[#allocation0]]
  $region26: #{tpu_custom_call.1} parent=0
    _
  %s5 = ssub.s32 1, %s3
  %s6 = scalar_select 0, %s5, %s3
  $region1: #{tpu_custom_call.1} parent=0
    #allocation2 [shape = 'u8[4096]{0}', space=vmem, size = 0x1000, scoped, tag = 'input window, operand 0, single buffered']
    #allocation3 [shape = 's32[1]{0}', space=sflag, size = 0x4, scoped, tag = 'scoped memory for tpu_custom_call.1']
    #allocation4 [shape = 's32[1]{0}', space=sflag, size = 0x4, scoped, tag = 'scoped memory for tpu_custom_call.1']
    #allocation5 [shape = 'u8[4096]{0}', space=vmem, size = 0x1000, scoped, tag = 'input window, operand 1, single buffered']
    #allocation6 [shape = 's32[1]{0}', space=sflag, size = 0x4, scoped, tag = 'scoped memory for tpu_custom_call.1']
    #allocation7 [shape = 'u8[4096]{0}', space=vmem, size = 0x1000, scoped, tag = 'output window, operand 0, single buffered']
    %7 = vsyncpa [#allocation3], 0
    %8 = vsyncpa [#allocation6], 0
    %9 = vsyncpa [#allocation4], 0
    // Predicated region
    $region2: #{tpu_custom_call.1} parent=1 // pred_check
      _
    $region3: #{tpu_custom_call.1} parent=1 // pred_check_branch
      %11 = sbr.rel (0) target = $region5
    $region4: #{tpu_custom_call.1} parent=1 // pred_region
      %s13 = ssub.s32 128, 128
      %14 = vsyncadd [#allocation3], %s13
      %s16 = sshll.u32 [#allocation2], 4
      %s17 = int_to_ptr.vmem [resolvable:$true] %s16
      %19 = dma.hbm_to_vmem [thread:$0]  %s0, 128, %s17, [#allocation3]
    $region5: #{tpu_custom_call.1} parent=1 // pred_fallthru
      _
    // Predicated region
    $region6: #{tpu_custom_call.1} parent=1 // pred_check
      _
    $region7: #{tpu_custom_call.1} parent=1 // pred_check_branch
      %21 = sbr.rel (0) target = $region9
    $region8: #{tpu_custom_call.1} parent=1 // pred_region
      %s23 = ssub.s32 128, 128
      %24 = vsyncadd [#allocation6], %s23
      %s26 = sshll.u32 [#allocation5], 4
      %s27 = int_to_ptr.vmem [resolvable:$true] %s26
      %29 = dma.hbm_to_vmem [thread:$0]  %s1, 128, %s27, [#allocation6]
    $region9: #{tpu_custom_call.1} parent=1 // pred_fallthru
      _
    // Predicated region
    $region10: #{tpu_custom_call.1} parent=1 // pred_check
      _
    $region11: #{tpu_custom_call.1} parent=1 // pred_check_branch
      %31 = sbr.rel (0) target = $region13
    $region12: #{tpu_custom_call.1} parent=1 // pred_region
      %32 = dma.done [#allocation3], 128
    $region13: #{tpu_custom_call.1} parent=1 // pred_fallthru
      _
    // Predicated region
    $region14: #{tpu_custom_call.1} parent=1 // pred_check
      _
    $region15: #{tpu_custom_call.1} parent=1 // pred_check_branch
      %34 = sbr.rel (0) target = $region17
    $region16: #{tpu_custom_call.1} parent=1 // pred_region
      %35 = dma.done [#allocation6], 128
    $region17: #{tpu_custom_call.1} parent=1 // pred_fallthru
      _
    %v36 = vld [vmem:[#allocation2] sm:$0xff]
    %v37 = vld [vmem:[#allocation5] sm:$0xff]
    %v38 = vsub.f32 %v36, 9.0
    %v39 = vsub.f32 -9.0, %v36
    %v40 = vmax.f32 %v38, %v39
    %v41 = vsub.f32 %v37, 9.0
    %v42 = vsub.f32 -9.0, %v37
    %v43 = vmax.f32 %v41, %v42
    %v44 = vmax.f32 %v40, %v43
    %v45 = vmax.f32 %v44, 0.0
    %46 = vst [vmem:[#allocation7] sm:$0xff] %v45
    // Predicated region
    $region18: #{tpu_custom_call.1} parent=1 // pred_check
      _
    $region19: #{tpu_custom_call.1} parent=1 // pred_check_branch
      %48 = sbr.rel (0) target = $region21
    $region20: #{tpu_custom_call.1} parent=1 // pred_region
      %s50 = ssub.s32 128, 128
      %51 = vsyncadd [#allocation4], %s50
      %s53 = sshll.u32 [#allocation7], 4
      %s54 = int_to_ptr.vmem [resolvable:$true] %s53
      %56 = dma.vmem_to_hbm [thread:$0]  %s54, 128, %s2, [#allocation4]
    $region21: #{tpu_custom_call.1} parent=1 // pred_fallthru
      _
    // Predicated region
    $region22: #{tpu_custom_call.1} parent=1 // pred_check
      _
    $region23: #{tpu_custom_call.1} parent=1 // pred_check_branch
      %58 = sbr.rel (0) target = $region25
    $region24: #{tpu_custom_call.1} parent=1 // pred_region
      %59 = dma.done [#allocation4], 128
    $region25: #{tpu_custom_call.1} parent=1 // pred_fallthru
      _
    %60 = vsyncpa [#allocation3], 1
    %61 = vsyncpa [#allocation6], 1
    %62 = vsyncpa [#allocation4], 1

</llo_original>
